<compile_context>
chip_gen: v7x
topology: tpu7x:2x2x1
jax: 0.10.0
libtpu: 0.0.40
codegen_flags: <defaults>
</compile_context>

<pallas_src>
import jax
import jax.numpy as jnp
from jax import lax
from jax.experimental import pallas as pl
from jax.experimental.pallas import tpu as pltpu


def _dynamic_cache_kernel(
    xcat_ref,     # (T*B, 2I) VMEM : row (t,b) = [x(t,b), x(T-1-t,b)]
    w_in_ref,     # (2I, 2H)  VMEM : blockdiag(Wih_f^T, Wih_b^T)
    b_in_ref,     # (1, 2H)   VMEM : [b_ih_f + b_hh_f, b_ih_b + b_hh_b]
    w_hh_ref,     # (2H, 2H)  VMEM : blockdiag(Whh_f^T, Whh_b^T)
    wlin_f_ref,   # (1, 2H)   VMEM : [lin_w[:H], zeros(H)]
    wlin_b_ref,   # (1, 2H)   VMEM : [zeros(H), lin_w[H:]]
    scalars_ref,  # SMEM (2,) : [linear bias, 1 / len(input_ids[-1])]
    out_ref,      # (1, T)    VMEM : cache_logits, lane-dense
    xw_s,         # scratch VMEM (T*B, 2H)
):
    TB, two_h = xw_s.shape
    T = out_ref.shape[1]
    B = TB // T

    # ---- hoisted input projection: one MXU matmul, biases folded in once ----
    xw_s[...] = (
        jnp.dot(xcat_ref[...], w_in_ref[...], preferred_element_type=jnp.float32)
        + b_in_ref[...]
    )

    # Hoist all weight loads out of the loop.
    w_hh = w_hh_ref[...]
    wlin_f = wlin_f_ref[...]
    wlin_b = wlin_b_ref[...]

    # ---- merged fwd+bwd recurrence, fully unrolled (T static, small) ----
    h = jnp.zeros((B, two_h), jnp.float32)   # [h_fwd(t) | h_bwd(T-1-t)]
    zf = []   # zf[t]  : head partial from forward state at time t       -> (B,1)
    zb = []   # zb[t]  : head partial from backward state at time T-1-t  -> (B,1)
    for t in range(T):
        xw_t = xw_s[t * B:(t + 1) * B, :]                          # (B, 2H)
        h = jnp.tanh(
            xw_t + jnp.dot(h, w_hh, preferred_element_type=jnp.float32))
        # Fused linear head (padded weights avoid lane slicing); these
        # reductions are off the serial h-chain.
        zf.append(jnp.sum(h * wlin_f, axis=1, keepdims=True))
        zb.append(jnp.sum(h * wlin_b, axis=1, keepdims=True))

    # ---- epilogue: assemble per-time logits, sigmoid, batch reduction ----
    b_lin = scalars_ref[0]
    inv_len = scalars_ref[1]
    # Backward contribution at time t was produced at step T-1-t (Python-level
    # reindexing; free because the loop is unrolled).
    z = jnp.concatenate([zf[t] + zb[T - 1 - t] for t in range(T)], axis=1)  # (B,T)
    probs = jax.nn.sigmoid(z + b_lin)
    out_ref[...] = jnp.sum(probs, axis=0, keepdims=True) * inv_len          # (1,T)


def dynamic_cache_forward(sequence_output, input_ids, params):
    """Returns cache_logits of shape (T,), matching DynamicCache.forward."""
    T, B, I = sequence_output.shape
    H = params["whh_f"].shape[0]

    x = sequence_output.astype(jnp.float32)
    # Row (t,b) holds [x(t,b), x(T-1-t,b)] so both directions index time t.
    xcat2d = jnp.concatenate([x, x[::-1]], axis=-1).reshape(T * B, 2 * I)

    zIH = jnp.zeros((I, H), jnp.float32)
    zHH = jnp.zeros((H, H), jnp.float32)
    zH = jnp.zeros((H,), jnp.float32)

    w_in_blk = jnp.concatenate(
        [jnp.concatenate([params["wih_f"].T.astype(jnp.float32), zIH], axis=1),
         jnp.concatenate([zIH, params["wih_b"].T.astype(jnp.float32)], axis=1)],
        axis=0)                                                     # (2I, 2H)
    w_hh_blk = jnp.concatenate(
        [jnp.concatenate([params["whh_f"].T.astype(jnp.float32), zHH], axis=1),
         jnp.concatenate([zHH, params["whh_b"].T.astype(jnp.float32)], axis=1)],
        axis=0)                                                     # (2H, 2H)
    b_in = jnp.concatenate(
        [params["bih_f"] + params["bhh_f"],
         params["bih_b"] + params["bhh_b"]]).astype(jnp.float32).reshape(1, 2 * H)

    wlin = params["lin_w"][0].astype(jnp.float32)                   # (2H,)
    wlin_f = jnp.concatenate([wlin[:H], zH]).reshape(1, 2 * H)
    wlin_b = jnp.concatenate([zH, wlin[H:]]).reshape(1, 2 * H)

    inv_len = jnp.float32(1.0 / input_ids.shape[-1])    # len(input_ids[-1])
    scalars = jnp.stack(
        [params["lin_b"].reshape(()).astype(jnp.float32), inv_len])

    vmem = pl.BlockSpec(memory_space=pltpu.MemorySpace.VMEM)
    smem = pl.BlockSpec(memory_space=pltpu.MemorySpace.SMEM)

    out = pl.pallas_call(
        _dynamic_cache_kernel,
        out_shape=jax.ShapeDtypeStruct((1, T), jnp.float32),
        in_specs=[vmem] * 6 + [smem],
        out_specs=vmem,
        scratch_shapes=[pltpu.VMEM((T * B, 2 * H), jnp.float32)],
    )(xcat2d, w_in_blk, b_in, w_hh_blk, wlin_f, wlin_b, scalars)

    return out[0]  # torch .squeeze() -> (T,)


def reference_forward(sequence_output, input_ids, p):
    """Pure-JAX reference matching the PyTorch bidirectional tanh-RNN math."""
    x = sequence_output.astype(jnp.float32)
    T, B, _ = x.shape
    H = p["whh_f"].shape[0]

    def run_dir(wih, whh, bih, bhh, xs):
        def step(h, x_t):
            h_new = jnp.tanh(x_t @ wih.T + bih + h @ whh.T + bhh)
            return h_new, h_new
        _, hs = lax.scan(step, jnp.zeros((B, H), jnp.float32), xs)
        return hs

    hs_f = run_dir(p["wih_f"], p["whh_f"], p["bih_f"], p["bhh_f"], x)
    hs_b = run_dir(p["wih_b"], p["whh_b"], p["bih_b"], p["bhh_b"], x[::-1])[::-1]
    rnn_out = jnp.concatenate([hs_f, hs_b], axis=-1)             # (T, B, 2H)
    lin = rnn_out @ p["lin_w"].T + p["lin_b"]                    # (T, B, 1)
    logits = jnp.sum(jax.nn.sigmoid(lin), axis=1) / input_ids.shape[-1]
    return logits.squeeze()


def init_params(key, input_size, cache_dim):
    """Deterministic init, mirroring nn.RNN / nn.Linear shapes."""
    H, I = cache_dim, input_size
    bound_rnn = 1.0 / jnp.sqrt(jnp.float32(H))
    bound_lin = 1.0 / jnp.sqrt(jnp.float32(2 * H))
    keys = jax.random.split(key, 10)
    u = lambda k, shape, b: jax.random.uniform(
        k, shape, jnp.float32, minval=-b, maxval=b)
    return {
        "wih_f": u(keys[0], (H, I), bound_rnn),
        "whh_f": u(keys[1], (H, H), bound_rnn),
        "bih_f": u(keys[2], (H,), bound_rnn),
        "bhh_f": u(keys[3], (H,), bound_rnn),
        "wih_b": u(keys[4], (H, I), bound_rnn),
        "whh_b": u(keys[5], (H, H), bound_rnn),
        "bih_b": u(keys[6], (H,), bound_rnn),
        "bhh_b": u(keys[7], (H,), bound_rnn),
        "lin_w": u(keys[8], (1, 2 * H), bound_lin),
        "lin_b": u(keys[9], (1,), bound_lin),
    }


if __name__ == "__main__":
    T, B, I, H, L = 8, 2, 32, 32, 16   # seq, batch, input_size, cache_dim, ids-per-row

    root = jax.random.PRNGKey(0)
    k_param, k_x, k_ids = jax.random.split(root, 3)
    params = init_params(k_param, input_size=I, cache_dim=H)

    sequence_output = jax.random.normal(k_x, (T, B, I), jnp.float32)
    input_ids = jax.random.randint(k_ids, (T, L), 0, 1000, jnp.int32)

    logits = dynamic_cache_forward(sequence_output, input_ids, params)
    logits = jax.block_until_ready(logits)

    ref = jax.block_until_ready(reference_forward(sequence_output, input_ids, params))
    assert logits.shape == (T,)
    assert jnp.allclose(logits, ref, atol=1e-4, rtol=1e-4), (logits, ref)

    print("KERNEL_OK")
</pallas_src>

<mosaic_0001>
module attributes {stable_mosaic.version = 11 : i64} {
  func.func @_dynamic_cache_kernel(%arg0: memref<16x64xf32, #tpu.memory_space<vmem>>, %arg1: memref<64x64xf32, #tpu.memory_space<vmem>>, %arg2: memref<1x64xf32, #tpu.memory_space<vmem>>, %arg3: memref<64x64xf32, #tpu.memory_space<vmem>>, %arg4: memref<1x64xf32, #tpu.memory_space<vmem>>, %arg5: memref<1x64xf32, #tpu.memory_space<vmem>>, %arg6: memref<2xf32, #tpu.memory_space<smem>>, %arg7: memref<1x8xf32, #tpu.memory_space<vmem>>, %arg8: memref<16x64xf32, #tpu.memory_space<vmem>>) attributes {dimension_semantics = [], scalar_prefetch = 0 : i64, scratch_operands = 1 : i64, tpu.core_type = #tpu.core_type<tc>} {
    %c0 = arith.constant 0 : index
    %c0_0 = arith.constant 0 : index
    %0 = vector.load %arg0[%c0, %c0_0] : memref<16x64xf32, #tpu.memory_space<vmem>>, vector<16x64xf32>
    %c0_1 = arith.constant 0 : index
    %c0_2 = arith.constant 0 : index
    %1 = vector.load %arg1[%c0_1, %c0_2] : memref<64x64xf32, #tpu.memory_space<vmem>>, vector<64x64xf32>
    %cst = arith.constant dense<0.000000e+00> : vector<16x64xf32>
    %2 = tpu.matmul %0, %1, %cst {dimension_numbers = #tpu.dot_dimension_numbers<[1], [0], [0], [1], [0, 0, 1, 1], [], []>} : vector<16x64xf32>, vector<64x64xf32>, vector<16x64xf32> -> vector<16x64xf32>
    %c0_3 = arith.constant 0 : index
    %c0_4 = arith.constant 0 : index
    %3 = vector.load %arg2[%c0_3, %c0_4] : memref<1x64xf32, #tpu.memory_space<vmem>>, vector<1x64xf32>
    %4 = vector.broadcast %3 : vector<1x64xf32> to vector<16x64xf32>
    %5 = arith.addf %2, %4 : vector<16x64xf32>
    %c0_5 = arith.constant 0 : index
    %c0_6 = arith.constant 0 : index
    %6 = vector.load %arg8[%c0_5, %c0_6] : memref<16x64xf32, #tpu.memory_space<vmem>>, vector<16x64xf32>
    tpu.vector_store %arg8[%c0_5, %c0_6], %5 {strides = array<i32>} : memref<16x64xf32, #tpu.memory_space<vmem>>, vector<16x64xf32>,
    %c0_7 = arith.constant 0 : index
    %c0_8 = arith.constant 0 : index
    %7 = vector.load %arg3[%c0_7, %c0_8] : memref<64x64xf32, #tpu.memory_space<vmem>>, vector<64x64xf32>
    %c0_9 = arith.constant 0 : index
    %c0_10 = arith.constant 0 : index
    %8 = vector.load %arg4[%c0_9, %c0_10] : memref<1x64xf32, #tpu.memory_space<vmem>>, vector<1x64xf32>
    %c0_11 = arith.constant 0 : index
    %c0_12 = arith.constant 0 : index
    %9 = vector.load %arg5[%c0_11, %c0_12] : memref<1x64xf32, #tpu.memory_space<vmem>>, vector<1x64xf32>
    %cst_13 = arith.constant 0.000000e+00 : f32
    %10 = vector.broadcast %cst_13 : f32 to vector<2x64xf32>
    %c0_14 = arith.constant 0 : index
    %c0_15 = arith.constant 0 : index
    %11 = vector.load %arg8[%c0_14, %c0_15] : memref<16x64xf32, #tpu.memory_space<vmem>>, vector<2x64xf32>
    %cst_16 = arith.constant dense<0.000000e+00> : vector<2x64xf32>
    %12 = tpu.matmul %10, %7, %cst_16 {dimension_numbers = #tpu.dot_dimension_numbers<[1], [0], [0], [1], [0, 0, 1, 1], [], []>} : vector<2x64xf32>, vector<64x64xf32>, vector<2x64xf32> -> vector<2x64xf32>
    %13 = arith.addf %11, %12 : vector<2x64xf32>
    %14 = math.tanh %13 : vector<2x64xf32>
    %15 = vector.broadcast %8 : vector<1x64xf32> to vector<2x64xf32>
    %16 = arith.mulf %14, %15 : vector<2x64xf32>
    %cst_17 = arith.constant dense<0.000000e+00> : vector<2xf32>
    %17 = vector.multi_reduction <add>, %16, %cst_17 [1] : vector<2x64xf32> to vector<2xf32>
    %18 = vector.shape_cast %17 : vector<2xf32> to vector<2x1xf32>
    %19 = vector.broadcast %9 : vector<1x64xf32> to vector<2x64xf32>
    %20 = arith.mulf %14, %19 : vector<2x64xf32>
    %cst_18 = arith.constant dense<0.000000e+00> : vector<2xf32>
    %21 = vector.multi_reduction <add>, %20, %cst_18 [1] : vector<2x64xf32> to vector<2xf32>
    %22 = vector.shape_cast %21 : vector<2xf32> to vector<2x1xf32>
    %c2 = arith.constant 2 : index
    %c0_19 = arith.constant 0 : index
    %23 = vector.load %arg8[%c2, %c0_19] : memref<16x64xf32, #tpu.memory_space<vmem>>, vector<2x64xf32>
    %cst_20 = arith.constant dense<0.000000e+00> : vector<2x64xf32>
    %24 = tpu.matmul %14, %7, %cst_20 {dimension_numbers = #tpu.dot_dimension_numbers<[1], [0], [0], [1], [0, 0, 1, 1], [], []>} : vector<2x64xf32>, vector<64x64xf32>, vector<2x64xf32> -> vector<2x64xf32>
    %25 = arith.addf %23, %24 : vector<2x64xf32>
    %26 = math.tanh %25 : vector<2x64xf32>
    %27 = vector.broadcast %8 : vector<1x64xf32> to vector<2x64xf32>
    %28 = arith.mulf %26, %27 : vector<2x64xf32>
    %cst_21 = arith.constant dense<0.000000e+00> : vector<2xf32>
    %29 = vector.multi_reduction <add>, %28, %cst_21 [1] : vector<2x64xf32> to vector<2xf32>
    %30 = vector.shape_cast %29 : vector<2xf32> to vector<2x1xf32>
    %31 = vector.broadcast %9 : vector<1x64xf32> to vector<2x64xf32>
    %32 = arith.mulf %26, %31 : vector<2x64xf32>
    %cst_22 = arith.constant dense<0.000000e+00> : vector<2xf32>
    %33 = vector.multi_reduction <add>, %32, %cst_22 [1] : vector<2x64xf32> to vector<2xf32>
    %34 = vector.shape_cast %33 : vector<2xf32> to vector<2x1xf32>
    %c4 = arith.constant 4 : index
    %c0_23 = arith.constant 0 : index
    %35 = vector.load %arg8[%c4, %c0_23] : memref<16x64xf32, #tpu.memory_space<vmem>>, vector<2x64xf32>
    %cst_24 = arith.constant dense<0.000000e+00> : vector<2x64xf32>
    %36 = tpu.matmul %26, %7, %cst_24 {dimension_numbers = #tpu.dot_dimension_numbers<[1], [0], [0], [1], [0, 0, 1, 1], [], []>} : vector<2x64xf32>, vector<64x64xf32>, vector<2x64xf32> -> vector<2x64xf32>
    %37 = arith.addf %35, %36 : vector<2x64xf32>
    %38 = math.tanh %37 : vector<2x64xf32>
    %39 = vector.broadcast %8 : vector<1x64xf32> to vector<2x64xf32>
    %40 = arith.mulf %38, %39 : vector<2x64xf32>
    %cst_25 = arith.constant dense<0.000000e+00> : vector<2xf32>
    %41 = vector.multi_reduction <add>, %40, %cst_25 [1] : vector<2x64xf32> to vector<2xf32>
    %42 = vector.shape_cast %41 : vector<2xf32> to vector<2x1xf32>
    %43 = vector.broadcast %9 : vector<1x64xf32> to vector<2x64xf32>
    %44 = arith.mulf %38, %43 : vector<2x64xf32>
    %cst_26 = arith.constant dense<0.000000e+00> : vector<2xf32>
    %45 = vector.multi_reduction <add>, %44, %cst_26 [1] : vector<2x64xf32> to vector<2xf32>
    %46 = vector.shape_cast %45 : vector<2xf32> to vector<2x1xf32>
    %c6 = arith.constant 6 : index
    %c0_27 = arith.constant 0 : index
    %47 = vector.load %arg8[%c6, %c0_27] : memref<16x64xf32, #tpu.memory_space<vmem>>, vector<2x64xf32>
    %cst_28 = arith.constant dense<0.000000e+00> : vector<2x64xf32>
    %48 = tpu.matmul %38, %7, %cst_28 {dimension_numbers = #tpu.dot_dimension_numbers<[1], [0], [0], [1], [0, 0, 1, 1], [], []>} : vector<2x64xf32>, vector<64x64xf32>, vector<2x64xf32> -> vector<2x64xf32>
    %49 = arith.addf %47, %48 : vector<2x64xf32>
    %50 = math.tanh %49 : vector<2x64xf32>
    %51 = vector.broadcast %8 : vector<1x64xf32> to vector<2x64xf32>
    %52 = arith.mulf %50, %51 : vector<2x64xf32>
    %cst_29 = arith.constant dense<0.000000e+00> : vector<2xf32>
    %53 = vector.multi_reduction <add>, %52, %cst_29 [1] : vector<2x64xf32> to vector<2xf32>
    %54 = vector.shape_cast %53 : vector<2xf32> to vector<2x1xf32>
    %55 = vector.broadcast %9 : vector<1x64xf32> to vector<2x64xf32>
    %56 = arith.mulf %50, %55 : vector<2x64xf32>
    %cst_30 = arith.constant dense<0.000000e+00> : vector<2xf32>
    %57 = vector.multi_reduction <add>, %56, %cst_30 [1] : vector<2x64xf32> to vector<2xf32>
    %58 = vector.shape_cast %57 : vector<2xf32> to vector<2x1xf32>
    %c8 = arith.constant 8 : index
    %c0_31 = arith.constant 0 : index
    %59 = vector.load %arg8[%c8, %c0_31] : memref<16x64xf32, #tpu.memory_space<vmem>>, vector<2x64xf32>
    %cst_32 = arith.constant dense<0.000000e+00> : vector<2x64xf32>
    %60 = tpu.matmul %50, %7, %cst_32 {dimension_numbers = #tpu.dot_dimension_numbers<[1], [0], [0], [1], [0, 0, 1, 1], [], []>} : vector<2x64xf32>, vector<64x64xf32>, vector<2x64xf32> -> vector<2x64xf32>
    %61 = arith.addf %59, %60 : vector<2x64xf32>
    %62 = math.tanh %61 : vector<2x64xf32>
    %63 = vector.broadcast %8 : vector<1x64xf32> to vector<2x64xf32>
    %64 = arith.mulf %62, %63 : vector<2x64xf32>
    %cst_33 = arith.constant dense<0.000000e+00> : vector<2xf32>
    %65 = vector.multi_reduction <add>, %64, %cst_33 [1] : vector<2x64xf32> to vector<2xf32>
    %66 = vector.shape_cast %65 : vector<2xf32> to vector<2x1xf32>
    %67 = vector.broadcast %9 : vector<1x64xf32> to vector<2x64xf32>
    %68 = arith.mulf %62, %67 : vector<2x64xf32>
    %cst_34 = arith.constant dense<0.000000e+00> : vector<2xf32>
    %69 = vector.multi_reduction <add>, %68, %cst_34 [1] : vector<2x64xf32> to vector<2xf32>
    %70 = vector.shape_cast %69 : vector<2xf32> to vector<2x1xf32>
    %c10 = arith.constant 10 : index
    %c0_35 = arith.constant 0 : index
    %71 = vector.load %arg8[%c10, %c0_35] : memref<16x64xf32, #tpu.memory_space<vmem>>, vector<2x64xf32>
    %cst_36 = arith.constant dense<0.000000e+00> : vector<2x64xf32>
    %72 = tpu.matmul %62, %7, %cst_36 {dimension_numbers = #tpu.dot_dimension_numbers<[1], [0], [0], [1], [0, 0, 1, 1], [], []>} : vector<2x64xf32>, vector<64x64xf32>, vector<2x64xf32> -> vector<2x64xf32>
    %73 = arith.addf %71, %72 : vector<2x64xf32>
    %74 = math.tanh %73 : vector<2x64xf32>
    %75 = vector.broadcast %8 : vector<1x64xf32> to vector<2x64xf32>
    %76 = arith.mulf %74, %75 : vector<2x64xf32>
    %cst_37 = arith.constant dense<0.000000e+00> : vector<2xf32>
    %77 = vector.multi_reduction <add>, %76, %cst_37 [1] : vector<2x64xf32> to vector<2xf32>
    %78 = vector.shape_cast %77 : vector<2xf32> to vector<2x1xf32>
    %79 = vector.broadcast %9 : vector<1x64xf32> to vector<2x64xf32>
    %80 = arith.mulf %74, %79 : vector<2x64xf32>
    %cst_38 = arith.constant dense<0.000000e+00> : vector<2xf32>
    %81 = vector.multi_reduction <add>, %80, %cst_38 [1] : vector<2x64xf32> to vector<2xf32>
    %82 = vector.shape_cast %81 : vector<2xf32> to vector<2x1xf32>
    %c12 = arith.constant 12 : index
    %c0_39 = arith.constant 0 : index
    %83 = vector.load %arg8[%c12, %c0_39] : memref<16x64xf32, #tpu.memory_space<vmem>>, vector<2x64xf32>
    %cst_40 = arith.constant dense<0.000000e+00> : vector<2x64xf32>
    %84 = tpu.matmul %74, %7, %cst_40 {dimension_numbers = #tpu.dot_dimension_numbers<[1], [0], [0], [1], [0, 0, 1, 1], [], []>} : vector<2x64xf32>, vector<64x64xf32>, vector<2x64xf32> -> vector<2x64xf32>
    %85 = arith.addf %83, %84 : vector<2x64xf32>
    %86 = math.tanh %85 : vector<2x64xf32>
    %87 = vector.broadcast %8 : vector<1x64xf32> to vector<2x64xf32>
    %88 = arith.mulf %86, %87 : vector<2x64xf32>
    %cst_41 = arith.constant dense<0.000000e+00> : vector<2xf32>
    %89 = vector.multi_reduction <add>, %88, %cst_41 [1] : vector<2x64xf32> to vector<2xf32>
    %90 = vector.shape_cast %89 : vector<2xf32> to vector<2x1xf32>
    %91 = vector.broadcast %9 : vector<1x64xf32> to vector<2x64xf32>
    %92 = arith.mulf %86, %91 : vector<2x64xf32>
    %cst_42 = arith.constant dense<0.000000e+00> : vector<2xf32>
    %93 = vector.multi_reduction <add>, %92, %cst_42 [1] : vector<2x64xf32> to vector<2xf32>
    %94 = vector.shape_cast %93 : vector<2xf32> to vector<2x1xf32>
    %c14 = arith.constant 14 : index
    %c0_43 = arith.constant 0 : index
    %95 = vector.load %arg8[%c14, %c0_43] : memref<16x64xf32, #tpu.memory_space<vmem>>, vector<2x64xf32>
    %cst_44 = arith.constant dense<0.000000e+00> : vector<2x64xf32>
    %96 = tpu.matmul %86, %7, %cst_44 {dimension_numbers = #tpu.dot_dimension_numbers<[1], [0], [0], [1], [0, 0, 1, 1], [], []>} : vector<2x64xf32>, vector<64x64xf32>, vector<2x64xf32> -> vector<2x64xf32>
    %97 = arith.addf %95, %96 : vector<2x64xf32>
    %98 = math.tanh %97 : vector<2x64xf32>
    %99 = vector.broadcast %8 : vector<1x64xf32> to vector<2x64xf32>
    %100 = arith.mulf %98, %99 : vector<2x64xf32>
    %cst_45 = arith.constant dense<0.000000e+00> : vector<2xf32>
    %101 = vector.multi_reduction <add>, %100, %cst_45 [1] : vector<2x64xf32> to vector<2xf32>
    %102 = vector.shape_cast %101 : vector<2xf32> to vector<2x1xf32>
    %103 = vector.broadcast %9 : vector<1x64xf32> to vector<2x64xf32>
    %104 = arith.mulf %98, %103 : vector<2x64xf32>
    %cst_46 = arith.constant dense<0.000000e+00> : vector<2xf32>
    %105 = vector.multi_reduction <add>, %104, %cst_46 [1] : vector<2x64xf32> to vector<2xf32>
    %106 = vector.shape_cast %105 : vector<2xf32> to vector<2x1xf32>
    %c0_47 = arith.constant 0 : index
    %107 = memref.load %arg6[%c0_47] : memref<2xf32, #tpu.memory_space<smem>>
    %c1 = arith.constant 1 : index
    %108 = memref.load %arg6[%c1] : memref<2xf32, #tpu.memory_space<smem>>
    %109 = arith.addf %18, %106 : vector<2x1xf32>
    %110 = arith.addf %30, %94 : vector<2x1xf32>
    %111 = arith.addf %42, %82 : vector<2x1xf32>
    %112 = arith.addf %54, %70 : vector<2x1xf32>
    %113 = arith.addf %66, %58 : vector<2x1xf32>
    %114 = arith.addf %78, %46 : vector<2x1xf32>
    %115 = arith.addf %90, %34 : vector<2x1xf32>
    %116 = arith.addf %102, %22 : vector<2x1xf32>
    %117 = tpu.concatenate %109, %110, %111, %112, %113, %114, %115, %116 in 1 : vector<2x1xf32>, vector<2x1xf32>, vector<2x1xf32>, vector<2x1xf32>, vector<2x1xf32>, vector<2x1xf32>, vector<2x1xf32>, vector<2x1xf32> -> vector<2x8xf32>
    %118 = vector.broadcast %107 : f32 to vector<2x8xf32>
    %119 = arith.addf %117, %118 : vector<2x8xf32>
    %120 = arith.negf %119 : vector<2x8xf32>
    %121 = math.exp %120 : vector<2x8xf32>
    %cst_48 = arith.constant 1.000000e+00 : f32
    %122 = vector.broadcast %cst_48 : f32 to vector<2x8xf32>
    %123 = arith.addf %122, %121 : vector<2x8xf32>
    %124 = arith.divf %122, %123 : vector<2x8xf32>
    %cst_49 = arith.constant dense<0.000000e+00> : vector<8xf32>
    %125 = vector.multi_reduction <add>, %124, %cst_49 [0] : vector<2x8xf32> to vector<8xf32>
    %126 = vector.shape_cast %125 : vector<8xf32> to vector<1x8xf32>
    %127 = vector.broadcast %108 : f32 to vector<1x8xf32>
    %128 = arith.mulf %126, %127 : vector<1x8xf32>
    %c0_50 = arith.constant 0 : index
    %c0_51 = arith.constant 0 : index
    %129 = vector.load %arg7[%c0_50, %c0_51] : memref<1x8xf32, #tpu.memory_space<vmem>>, vector<1x8xf32>
    tpu.vector_store %arg7[%c0_50, %c0_51], %128 {strides = array<i32>} : memref<1x8xf32, #tpu.memory_space<vmem>>, vector<1x8xf32>,
    return
  }
}

</mosaic_0001>

<llo_original>
// kernel: tpu_custom_call.1
$region0: #{tpu_custom_call.1}
  #allocation0 [shape = 'u32[]', space=smem, size = 0x4, offset = 0x4, fixed_abs, tag = 'smem constant byte address 0x4 - core index']
  #allocation1 [shape = 'u32[144,128]{1,0:T(1,128)}', space=vmem, size = 0x12000, scoped, tag = 'internal scratch']
  #allocation2 [shape = 'f32[16,64]{1,0:T(8,128)}', space=vmem, size = 0x2000, scoped, tag = 'scratch operand']
  %s0 = inlined_call_operand.hbm [shape: f32[16,64], index: 0, kind: input, shape index: {}]
  %s1 = inlined_call_operand.hbm [shape: f32[64,64], index: 1, kind: input, shape index: {}]
  %s2 = inlined_call_operand.vmem [shape: f32[1,64], index: 2, kind: input, shape index: {}]
  %s3 = inlined_call_operand.hbm [shape: f32[64,64], index: 3, kind: input, shape index: {}]
  %s4 = inlined_call_operand.vmem [shape: f32[1,64], index: 4, kind: input, shape index: {}]
  %s5 = inlined_call_operand.vmem [shape: f32[1,64], index: 5, kind: input, shape index: {}]
  %s6 = inlined_call_operand.vmem [shape: f32[2], index: 6, kind: input, shape index: {}]
  %s7 = inlined_call_operand.hbm [shape: f32[1,8], index: 7, kind: output, shape index: {}]
  %s8 = sld [smem:[#allocation0]]
  $region54: #{tpu_custom_call.1} parent=0
    _
  %s10 = ssub.s32 1, %s8
  %s11 = scalar_select 0, %s10, %s8
  $region1: #{tpu_custom_call.1} parent=0
    #allocation3 [shape = 'u8[8192]{0}', space=vmem, size = 0x2000, scoped, tag = 'input window, operand 0, single buffered']
    #allocation4 [shape = 's32[1]{0}', space=sflag, size = 0x4, scoped, tag = 'scoped memory for tpu_custom_call.1']
    #allocation5 [shape = 's32[1]{0}', space=sflag, size = 0x4, scoped, tag = 'scoped memory for tpu_custom_call.1']
    #allocation6 [shape = 's32[1]{0}', space=sflag, size = 0x4, scoped, tag = 'scoped memory for tpu_custom_call.1']
    #allocation7 [shape = 'u8[32768]{0}', space=vmem, size = 0x8000, scoped, tag = 'input window, operand 1, single buffered']
    #allocation8 [shape = 's32[1]{0}', space=sflag, size = 0x4, scoped, tag = 'scoped memory for tpu_custom_call.1']
    #allocation9 [shape = 'u8[32768]{0}', space=vmem, size = 0x8000, scoped, tag = 'input window, operand 3, single buffered']
    #allocation10 [shape = 'u8[512]{0}', space=smem, size = 0x200, scoped, tag = 'input window, operand 6, single buffered']
    #allocation11 [shape = 'u8[512]{0}', space=vmem, size = 0x400, scoped, tag = 'output window, operand 0, single buffered']
    %12 = vsyncpa [#allocation4], 0
    %13 = vsyncpa [#allocation8], 0
    %14 = vsyncpa [#allocation6], 0
    %15 = vsyncpa [#allocation5], 0
    // Predicated region
    $region2: #{tpu_custom_call.1} parent=1 // pred_check
      _
    $region3: #{tpu_custom_call.1} parent=1 // pred_check_branch
      %17 = sbr.rel (0) target = $region5
    $region4: #{tpu_custom_call.1} parent=1 // pred_region
      %s19 = ssub.s32 256, 256
      %20 = vsyncadd [#allocation4], %s19
      %s21 = sshll.u32 [#allocation3], 4
      %s22 = int_to_ptr.vmem [resolvable:$true] %s21
      %27 = dma.hbm_to_vmem [thread:$0]  %s0, 256, %s22, [#allocation4], 128, 128, 8
    $region5: #{tpu_custom_call.1} parent=1 // pred_fallthru
      _
    // Predicated region
    $region6: #{tpu_custom_call.1} parent=1 // pred_check
      _
    $region7: #{tpu_custom_call.1} parent=1 // pred_check_branch
      %29 = sbr.rel (0) target = $region9
    $region8: #{tpu_custom_call.1} parent=1 // pred_region
      %s31 = ssub.s32 1024, 1024
      %32 = vsyncadd [#allocation8], %s31
      %s33 = sshll.u32 [#allocation7], 4
      %s34 = int_to_ptr.vmem [resolvable:$true] %s33
      %39 = dma.hbm_to_vmem [thread:$0]  %s1, 1024, %s34, [#allocation8], 128, 128, 8
    $region9: #{tpu_custom_call.1} parent=1 // pred_fallthru
      _
    // Predicated region
    $region10: #{tpu_custom_call.1} parent=1 // pred_check
      _
    $region11: #{tpu_custom_call.1} parent=1 // pred_check_branch
      %41 = sbr.rel (0) target = $region13
    $region12: #{tpu_custom_call.1} parent=1 // pred_region
      _
    $region13: #{tpu_custom_call.1} parent=1 // pred_fallthru
      _
    // Predicated region
    $region14: #{tpu_custom_call.1} parent=1 // pred_check
      _
    $region15: #{tpu_custom_call.1} parent=1 // pred_check_branch
      %43 = sbr.rel (0) target = $region17
    $region16: #{tpu_custom_call.1} parent=1 // pred_region
      %s45 = ssub.s32 1024, 1024
      %46 = vsyncadd [#allocation8], %s45
      %s47 = sshll.u32 [#allocation9], 4
      %s48 = int_to_ptr.vmem [resolvable:$true] %s47
      %53 = dma.hbm_to_vmem [thread:$0]  %s3, 1024, %s48, [#allocation8], 128, 128, 8
    $region17: #{tpu_custom_call.1} parent=1 // pred_fallthru
      _
    // Predicated region
    $region18: #{tpu_custom_call.1} parent=1 // pred_check
      _
    $region19: #{tpu_custom_call.1} parent=1 // pred_check_branch
      %55 = sbr.rel (0) target = $region21
    $region20: #{tpu_custom_call.1} parent=1 // pred_region
      _
    $region21: #{tpu_custom_call.1} parent=1 // pred_fallthru
      _
    // Predicated region
    $region22: #{tpu_custom_call.1} parent=1 // pred_check
      _
    $region23: #{tpu_custom_call.1} parent=1 // pred_check_branch
      %57 = sbr.rel (0) target = $region25
    $region24: #{tpu_custom_call.1} parent=1 // pred_region
      _
    $region25: #{tpu_custom_call.1} parent=1 // pred_fallthru
      _
    // Predicated region
    $region26: #{tpu_custom_call.1} parent=1 // pred_check
      _
    $region27: #{tpu_custom_call.1} parent=1 // pred_check_branch
      %59 = sbr.rel (0) target = $region29
    $region28: #{tpu_custom_call.1} parent=1 // pred_region
      %s61 = ssub.s32 16, 16
      %62 = vsyncadd [#allocation6], %s61
      %s64 = sshll.u32 %s6, 4
      %s65 = int_to_ptr.vmem [resolvable:$true] %s64
      %67 = dma.vmem_to_smem %s65, 16, [#allocation10], [#allocation6]
    $region29: #{tpu_custom_call.1} parent=1 // pred_fallthru
      _
    // Predicated region
    $region30: #{tpu_custom_call.1} parent=1 // pred_check
      _
    $region31: #{tpu_custom_call.1} parent=1 // pred_check_branch
      %69 = sbr.rel (0) target = $region33
    $region32: #{tpu_custom_call.1} parent=1 // pred_region
      %70 = dma.done [#allocation4], 256
    $region33: #{tpu_custom_call.1} parent=1 // pred_fallthru
      _
    // Predicated region
    $region34: #{tpu_custom_call.1} parent=1 // pred_check
      _
    $region35: #{tpu_custom_call.1} parent=1 // pred_check_branch
      %72 = sbr.rel (0) target = $region37
    $region36: #{tpu_custom_call.1} parent=1 // pred_region
      %73 = dma.done [#allocation8], 1024
    $region37: #{tpu_custom_call.1} parent=1 // pred_fallthru
      _
    // Predicated region
    $region38: #{tpu_custom_call.1} parent=1 // pred_check
      _
    $region39: #{tpu_custom_call.1} parent=1 // pred_check_branch
      %75 = sbr.rel (0) target = $region41
    $region40: #{tpu_custom_call.1} parent=1 // pred_region
      %76 = dma.done [#allocation8], 1024
    $region41: #{tpu_custom_call.1} parent=1 // pred_fallthru
      _
    // Predicated region
    $region42: #{tpu_custom_call.1} parent=1 // pred_check
      _
    $region43: #{tpu_custom_call.1} parent=1 // pred_check_branch
      %78 = sbr.rel (0) target = $region45
    $region44: #{tpu_custom_call.1} parent=1 // pred_region
      %79 = dma.done [#allocation6], 16
    $region45: #{tpu_custom_call.1} parent=1 // pred_fallthru
      _
    %80 = sfence
    %v81 = vld [vmem:[#allocation3] sm:$0xff]
    %v82 = vld [vmem:[#allocation3 + $0x8] sm:$0xff]
    %v83 = vld [vmem:[#allocation7] sm:$0xff]
    %v84 = vld [vmem:[#allocation7 + $0x8] sm:$0xff]
    %v85 = vld [vmem:[#allocation7 + $0x10] sm:$0xff]
    %v86 = vld [vmem:[#allocation7 + $0x18] sm:$0xff]
    %v87 = vld [vmem:[#allocation7 + $0x20] sm:$0xff]
    %v88 = vld [vmem:[#allocation7 + $0x28] sm:$0xff]
    %v89 = vld [vmem:[#allocation7 + $0x30] sm:$0xff]
    %v90 = vld [vmem:[#allocation7 + $0x38] sm:$0xff]
    %v91 = vld [vmem:[%s2] sm:$0x1]
    %v93 = vlaneseq
    %v94 = vshrl.u32 %v93, 7
    %v95 = vsub.s32 0, %v94
    %v96 = vrot.slane %v91, %v95
    %vm98 = vcmask 523264
    %v100 = vsel %vm98, %v81, 0
    %v103 = vsel %vm98, %v82, 0
    %105 = vmatprep.subr.mxu0 0.0
    %106 = vmatpush1.msra.mxu0 %v83
    %107 = vmatprep.subr.mxu0 0.0
    %108 = vmatpush1.msra.mxu0 %v84
    %109 = vmatprep.subr.mxu0 0.0
    %110 = vmatpush1.msra.mxu0 %v85
    %111 = vmatprep.subr.mxu0 0.0
    %112 = vmatpush1.msra.mxu0 %v86
    %113 = vmatprep.subr.mxu0 0.0
    %114 = vmatpush1.msra.mxu0 %v87
    %115 = vmatprep.subr.mxu0 0.0
    %116 = vmatpush1.msra.mxu0 %v88
    %117 = vmatprep.subr.mxu0 0.0
    %118 = vmatpush1.msra.mxu0 %v89
    %119 = vmatprep.subr.mxu0 0.0
    %120 = vmatpush1.msra.mxu0 %v90
    %121 = vmatprep.subr.mxu0 0.0
    %122 = vmatpush1.msra.mxu0 0.0
    %123 = vmatprep.subr.mxu0 0.0
    %124 = vmatpush1.msra.mxu0 0.0
    %125 = vmatprep.subr.mxu0 0.0
    %126 = vmatpush1.msra.mxu0 0.0
    %127 = vmatprep.subr.mxu0 0.0
    %128 = vmatpush1.msra.mxu0 0.0
    %129 = vmatprep.subr.mxu0 0.0
    %130 = vmatpush1.msra.mxu0 0.0
    %131 = vmatprep.subr.mxu0 0.0
    %132 = vmatpush1.msra.mxu0 0.0
    %133 = vmatprep.subr.mxu0 0.0
    %134 = vmatpush1.msra.mxu0 0.0
    %135 = vmatprep.subr.mxu0 0.0
    %136 = vmatpush1.msra.mxu0 0.0
    %137 = vmatprep.subr.mxu0 0.0
    %138 = vmatpush1.msra.mxu0 0.0
    %139 = vmatprep.subr.mxu0 0.0
    %140 = vmatpush1.msra.mxu0 0.0
    %141 = vmatprep.subr.mxu0 0.0
    %142 = vmatpush1.msra.mxu0 0.0
    %143 = vmatprep.subr.mxu0 0.0
    %144 = vmatpush1.msra.mxu0 0.0
    %145 = vmatprep.subr.mxu0 0.0
    %146 = vmatpush1.msra.mxu0 0.0
    %147 = vmatprep.subr.mxu0 0.0
    %148 = vmatpush1.msra.mxu0 0.0
    %149 = vmatprep.subr.mxu0 0.0
    %150 = vmatpush1.msra.mxu0 0.0
    %151 = vmatprep.subr.mxu0 0.0
    %152 = vmatpush1.msra.mxu0 0.0
    %153 = vmatprep.subr.mxu0 0.0
    %154 = vmatpush1.msra.mxu0 0.0
    %155 = vmatprep.subr.mxu0 0.0
    %156 = vmatpush1.msra.mxu0 0.0
    %157 = vmatprep.subr.mxu0 0.0
    %158 = vmatpush1.msra.mxu0 0.0
    %159 = vmatprep.subr.mxu0 0.0
    %160 = vmatpush1.msra.mxu0 0.0
    %161 = vmatprep.subr.mxu0 0.0
    %162 = vmatpush1.msra.mxu0 0.0
    %163 = vmatprep.subr.mxu0 0.0
    %164 = vmatpush1.msra.mxu0 0.0
    %165 = vmatprep.subr.mxu0 0.0
    %166 = vmatpush1.msra.mxu0 0.0
    %167 = vmatprep.subr.mxu0 0.0
    %168 = vmatpush1.msra.mxu0 0.0
    %169 = vmatprep.mubr.f32.mxu0 0.0
    %170 = vmatmul.mubr.f32.gmra.mrb[0].mxu0 %v100
    %v171 = vpop.f32.mrb[0].mxu0
    %v172 = vadd.f32 %v96, %v171
    %v173 = vpop.f32.mrb[0].mxu0
    %174 = vmatprep.mubr.f32.mxu0 0.0
    %175 = vmatmul.mubr.f32.gmra.mrb[0].mxu0 %v103
    %v176 = vpop.f32.mrb[0].mxu0
    %v177 = vadd.f32 %v96, %v176
    %v178 = vpop.f32.mrb[0].mxu0
    %179 = vdwg.mxu0
    %180 = vst.msk [vmem:[#allocation2] sm:$0xff] %vm98, %v172
    %181 = vst.msk [vmem:[#allocation2 + $0x8] sm:$0xff] %vm98, %v177
    %v182 = vld [vmem:[#allocation9] sm:$0xff]
    %v183 = vld [vmem:[#allocation9 + $0x8] sm:$0xff]
    %v184 = vld [vmem:[#allocation9 + $0x10] sm:$0xff]
    %v185 = vld [vmem:[#allocation9 + $0x18] sm:$0xff]
    %v186 = vld [vmem:[#allocation9 + $0x20] sm:$0xff]
    %v187 = vld [vmem:[#allocation9 + $0x28] sm:$0xff]
    %v188 = vld [vmem:[#allocation9 + $0x30] sm:$0xff]
    %v189 = vld [vmem:[#allocation9 + $0x38] sm:$0xff]
    %v190 = vld [vmem:[%s4] sm:$0x1]
    %v191 = vld [vmem:[%s5] sm:$0x1]
    %v192 = vld [vmem:[#allocation2] sm:$0x3]
    %v194 = vsel %vm98, 0.0, 0
    %196 = vmatprep.subr.mxu0 0.0
    %197 = vmatpush1.msra.mxu0 %v182
    %198 = vmatprep.subr.mxu0 0.0
    %199 = vmatpush1.msra.mxu0 %v183
    %200 = vmatprep.subr.mxu0 0.0
    %201 = vmatpush1.msra.mxu0 %v184
    %202 = vmatprep.subr.mxu0 0.0
    %203 = vmatpush1.msra.mxu0 %v185
    %204 = vmatprep.subr.mxu0 0.0
    %205 = vmatpush1.msra.mxu0 %v186
    %206 = vmatprep.subr.mxu0 0.0
    %207 = vmatpush1.msra.mxu0 %v187
    %208 = vmatprep.subr.mxu0 0.0
    %209 = vmatpush1.msra.mxu0 %v188
    %210 = vmatprep.subr.mxu0 0.0
    %211 = vmatpush1.msra.mxu0 %v189
    %212 = vmatprep.subr.mxu0 0.0
    %213 = vmatpush1.msra.mxu0 0.0
    %214 = vmatprep.subr.mxu0 0.0
    %215 = vmatpush1.msra.mxu0 0.0
    %216 = vmatprep.subr.mxu0 0.0
    %217 = vmatpush1.msra.mxu0 0.0
    %218 = vmatprep.subr.mxu0 0.0
    %219 = vmatpush1.msra.mxu0 0.0
    %220 = vmatprep.subr.mxu0 0.0
    %221 = vmatpush1.msra.mxu0 0.0
    %222 = vmatprep.subr.mxu0 0.0
    %223 = vmatpush1.msra.mxu0 0.0
    %224 = vmatprep.subr.mxu0 0.0
    %225 = vmatpush1.msra.mxu0 0.0
    %226 = vmatprep.subr.mxu0 0.0
    %227 = vmatpush1.msra.mxu0 0.0
    %228 = vmatprep.subr.mxu0 0.0
    %229 = vmatpush1.msra.mxu0 0.0
    %230 = vmatprep.subr.mxu0 0.0
    %231 = vmatpush1.msra.mxu0 0.0
    %232 = vmatprep.subr.mxu0 0.0
    %233 = vmatpush1.msra.mxu0 0.0
    %234 = vmatprep.subr.mxu0 0.0
    %235 = vmatpush1.msra.mxu0 0.0
    %236 = vmatprep.subr.mxu0 0.0
    %237 = vmatpush1.msra.mxu0 0.0
    %238 = vmatprep.subr.mxu0 0.0
    %239 = vmatpush1.msra.mxu0 0.0
    %240 = vmatprep.subr.mxu0 0.0
    %241 = vmatpush1.msra.mxu0 0.0
    %242 = vmatprep.subr.mxu0 0.0
    %243 = vmatpush1.msra.mxu0 0.0
    %244 = vmatprep.subr.mxu0 0.0
    %245 = vmatpush1.msra.mxu0 0.0
    %246 = vmatprep.subr.mxu0 0.0
    %247 = vmatpush1.msra.mxu0 0.0
    %248 = vmatprep.subr.mxu0 0.0
    %249 = vmatpush1.msra.mxu0 0.0
    %250 = vmatprep.subr.mxu0 0.0
    %251 = vmatpush1.msra.mxu0 0.0
    %252 = vmatprep.subr.mxu0 0.0
    %253 = vmatpush1.msra.mxu0 0.0
    %254 = vmatprep.subr.mxu0 0.0
    %255 = vmatpush1.msra.mxu0 0.0
    %256 = vmatprep.subr.mxu0 0.0
    %257 = vmatpush1.msra.mxu0 0.0
    %258 = vmatprep.subr.mxu0 0.0
    %259 = vmatpush1.msra.mxu0 0.0
    %260 = vmatprep.mubr.f32.mxu0 0.0
    %261 = vmatmul.mubr.f32.gmra.mrb[0].mxu0 %v194
    %v262 = vpop.f32.mrb[0].mxu0
    %v263 = vadd.f32 0.0, %v262
    %v264 = vpop.f32.mrb[0].mxu0
    %265 = vdwg.mxu0
    %v266 = vadd.f32 %v192, %v263
    %v267 = vtanh.pop %v266
    %v269 = vlaneseq
    %v270 = vshrl.u32 %v269, 7
    %v271 = vsub.s32 0, %v270
    %v272 = vrot.slane %v190, %v271
    %v274 = vmul.f32 %v267, %v272
    %vm275 = vcmask 517120
    %v276 = vsel %vm275, %v274, 0.0
    %277 = vadd.xlane.f32.xlu0 %v276
    %v278 = vpop.xlane.xlu0 %277
    %v280 = vlaneseq
    %v281 = vshrl.u32 %v280, 7
    %v282 = vsub.s32 0, %v281
    %v283 = vrot.slane %v191, %v282
    %v285 = vmul.f32 %v267, %v283
    %v286 = vsel %vm275, %v285, 0.0
    %287 = vadd.xlane.f32.xlu0 %v286
    %v288 = vpop.xlane.xlu0 %287
    %v289 = vld [vmem:[#allocation2 + $0x2] sm:$0x3]
    %v291 = vsel %vm98, %v267, 0
    %293 = vmatprep.subr.mxu0 0.0
    %294 = vmatpush1.msra.mxu0 %v182
    %295 = vmatprep.subr.mxu0 0.0
    %296 = vmatpush1.msra.mxu0 %v183
    %297 = vmatprep.subr.mxu0 0.0
    %298 = vmatpush1.msra.mxu0 %v184
    %299 = vmatprep.subr.mxu0 0.0
    %300 = vmatpush1.msra.mxu0 %v185
    %301 = vmatprep.subr.mxu0 0.0
    %302 = vmatpush1.msra.mxu0 %v186
    %303 = vmatprep.subr.mxu0 0.0
    %304 = vmatpush1.msra.mxu0 %v187
    %305 = vmatprep.subr.mxu0 0.0
    %306 = vmatpush1.msra.mxu0 %v188
    %307 = vmatprep.subr.mxu0 0.0
    %308 = vmatpush1.msra.mxu0 %v189
    %309 = vmatprep.subr.mxu0 0.0
    %310 = vmatpush1.msra.mxu0 0.0
    %311 = vmatprep.subr.mxu0 0.0
    %312 = vmatpush1.msra.mxu0 0.0
    %313 = vmatprep.subr.mxu0 0.0
    %314 = vmatpush1.msra.mxu0 0.0
    %315 = vmatprep.subr.mxu0 0.0
    %316 = vmatpush1.msra.mxu0 0.0
    %317 = vmatprep.subr.mxu0 0.0
    %318 = vmatpush1.msra.mxu0 0.0
    %319 = vmatprep.subr.mxu0 0.0
    %320 = vmatpush1.msra.mxu0 0.0
    %321 = vmatprep.subr.mxu0 0.0
    %322 = vmatpush1.msra.mxu0 0.0
    %323 = vmatprep.subr.mxu0 0.0
    %324 = vmatpush1.msra.mxu0 0.0
    %325 = vmatprep.subr.mxu0 0.0
    %326 = vmatpush1.msra.mxu0 0.0
    %327 = vmatprep.subr.mxu0 0.0
    %328 = vmatpush1.msra.mxu0 0.0
    %329 = vmatprep.subr.mxu0 0.0
    %330 = vmatpush1.msra.mxu0 0.0
    %331 = vmatprep.subr.mxu0 0.0
    %332 = vmatpush1.msra.mxu0 0.0
    %333 = vmatprep.subr.mxu0 0.0
    %334 = vmatpush1.msra.mxu0 0.0
    %335 = vmatprep.subr.mxu0 0.0
    %336 = vmatpush1.msra.mxu0 0.0
    %337 = vmatprep.subr.mxu0 0.0
    %338 = vmatpush1.msra.mxu0 0.0
    %339 = vmatprep.subr.mxu0 0.0
    %340 = vmatpush1.msra.mxu0 0.0
    %341 = vmatprep.subr.mxu0 0.0
    %342 = vmatpush1.msra.mxu0 0.0
    %343 = vmatprep.subr.mxu0 0.0
    %344 = vmatpush1.msra.mxu0 0.0
    %345 = vmatprep.subr.mxu0 0.0
    %346 = vmatpush1.msra.mxu0 0.0
    %347 = vmatprep.subr.mxu0 0.0
    %348 = vmatpush1.msra.mxu0 0.0
    %349 = vmatprep.subr.mxu0 0.0
    %350 = vmatpush1.msra.mxu0 0.0
    %351 = vmatprep.subr.mxu0 0.0
    %352 = vmatpush1.msra.mxu0 0.0
    %353 = vmatprep.subr.mxu0 0.0
    %354 = vmatpush1.msra.mxu0 0.0
    %355 = vmatprep.subr.mxu0 0.0
    %356 = vmatpush1.msra.mxu0 0.0
    %357 = vmatprep.mubr.f32.mxu0 0.0
    %358 = vmatmul.mubr.f32.gmra.mrb[0].mxu0 %v291
    %v359 = vpop.f32.mrb[0].mxu0
    %v360 = vadd.f32 0.0, %v359
    %v361 = vpop.f32.mrb[0].mxu0
    %362 = vdwg.mxu0
    %v363 = vadd.f32 %v289, %v360
    %v364 = vtanh.pop %v363
    %v365 = vmul.f32 %v364, %v272
    %v366 = vsel %vm275, %v365, 0.0
    %367 = vadd.xlane.f32.xlu0 %v366
    %v368 = vpop.xlane.xlu0 %367
    %v369 = vmul.f32 %v364, %v283
    %v370 = vsel %vm275, %v369, 0.0
    %371 = vadd.xlane.f32.xlu0 %v370
    %v372 = vpop.xlane.xlu0 %371
    %v373 = vld [vmem:[#allocation2 + $0x4] sm:$0x3]
    %v375 = vsel %vm98, %v364, 0
    %377 = vmatprep.subr.mxu0 0.0
    %378 = vmatpush1.msra.mxu0 %v182
    %379 = vmatprep.subr.mxu0 0.0
    %380 = vmatpush1.msra.mxu0 %v183
    %381 = vmatprep.subr.mxu0 0.0
    %382 = vmatpush1.msra.mxu0 %v184
    %383 = vmatprep.subr.mxu0 0.0
    %384 = vmatpush1.msra.mxu0 %v185
    %385 = vmatprep.subr.mxu0 0.0
    %386 = vmatpush1.msra.mxu0 %v186
    %387 = vmatprep.subr.mxu0 0.0
    %388 = vmatpush1.msra.mxu0 %v187
    %389 = vmatprep.subr.mxu0 0.0
    %390 = vmatpush1.msra.mxu0 %v188
    %391 = vmatprep.subr.mxu0 0.0
    %392 = vmatpush1.msra.mxu0 %v189
    %393 = vmatprep.subr.mxu0 0.0
    %394 = vmatpush1.msra.mxu0 0.0
    %395 = vmatprep.subr.mxu0 0.0
    %396 = vmatpush1.msra.mxu0 0.0
    %397 = vmatprep.subr.mxu0 0.0
    %398 = vmatpush1.msra.mxu0 0.0
    %399 = vmatprep.subr.mxu0 0.0
    %400 = vmatpush1.msra.mxu0 0.0
    %401 = vmatprep.subr.mxu0 0.0
    %402 = vmatpush1.msra.mxu0 0.0
    %403 = vmatprep.subr.mxu0 0.0
    %404 = vmatpush1.msra.mxu0 0.0
    %405 = vmatprep.subr.mxu0 0.0
    %406 = vmatpush1.msra.mxu0 0.0
    %407 = vmatprep.subr.mxu0 0.0
    %408 = vmatpush1.msra.mxu0 0.0
    %409 = vmatprep.subr.mxu0 0.0
    %410 = vmatpush1.msra.mxu0 0.0
    %411 = vmatprep.subr.mxu0 0.0
    %412 = vmatpush1.msra.mxu0 0.0
    %413 = vmatprep.subr.mxu0 0.0
    %414 = vmatpush1.msra.mxu0 0.0
    %415 = vmatprep.subr.mxu0 0.0
    %416 = vmatpush1.msra.mxu0 0.0
    %417 = vmatprep.subr.mxu0 0.0
    %418 = vmatpush1.msra.mxu0 0.0
    %419 = vmatprep.subr.mxu0 0.0
    %420 = vmatpush1.msra.mxu0 0.0
    %421 = vmatprep.subr.mxu0 0.0
    %422 = vmatpush1.msra.mxu0 0.0
    %423 = vmatprep.subr.mxu0 0.0
    %424 = vmatpush1.msra.mxu0 0.0
    %425 = vmatprep.subr.mxu0 0.0
    %426 = vmatpush1.msra.mxu0 0.0
    %427 = vmatprep.subr.mxu0 0.0
    %428 = vmatpush1.msra.mxu0 0.0
    %429 = vmatprep.subr.mxu0 0.0
    %430 = vmatpush1.msra.mxu0 0.0
    %431 = vmatprep.subr.mxu0 0.0
    %432 = vmatpush1.msra.mxu0 0.0
    %433 = vmatprep.subr.mxu0 0.0
    %434 = vmatpush1.msra.mxu0 0.0
    %435 = vmatprep.subr.mxu0 0.0
    %436 = vmatpush1.msra.mxu0 0.0
    %437 = vmatprep.subr.mxu0 0.0
    %438 = vmatpush1.msra.mxu0 0.0
    %439 = vmatprep.subr.mxu0 0.0
    %440 = vmatpush1.msra.mxu0 0.0
    %441 = vmatprep.mubr.f32.mxu0 0.0
    %442 = vmatmul.mubr.f32.gmra.mrb[0].mxu0 %v375
    %v443 = vpop.f32.mrb[0].mxu0
    %v444 = vadd.f32 0.0, %v443
    %v445 = vpop.f32.mrb[0].mxu0
    %446 = vdwg.mxu0
    %v447 = vadd.f32 %v373, %v444
    %v448 = vtanh.pop %v447
    %v449 = vmul.f32 %v448, %v272
    %v450 = vsel %vm275, %v449, 0.0
    %451 = vadd.xlane.f32.xlu0 %v450
    %v452 = vpop.xlane.xlu0 %451
    %v453 = vmul.f32 %v448, %v283
    %v454 = vsel %vm275, %v453, 0.0
    %455 = vadd.xlane.f32.xlu0 %v454
    %v456 = vpop.xlane.xlu0 %455
    %v457 = vld [vmem:[#allocation2 + $0x6] sm:$0x3]
    %v459 = vsel %vm98, %v448, 0
    %461 = vmatprep.subr.mxu0 0.0
    %462 = vmatpush1.msra.mxu0 %v182
    %463 = vmatprep.subr.mxu0 0.0
    %464 = vmatpush1.msra.mxu0 %v183
    %465 = vmatprep.subr.mxu0 0.0
    %466 = vmatpush1.msra.mxu0 %v184
    %467 = vmatprep.subr.mxu0 0.0
    %468 = vmatpush1.msra.mxu0 %v185
    %469 = vmatprep.subr.mxu0 0.0
    %470 = vmatpush1.msra.mxu0 %v186
    %471 = vmatprep.subr.mxu0 0.0
    %472 = vmatpush1.msra.mxu0 %v187
    %473 = vmatprep.subr.mxu0 0.0
    %474 = vmatpush1.msra.mxu0 %v188
    %475 = vmatprep.subr.mxu0 0.0
    %476 = vmatpush1.msra.mxu0 %v189
    %477 = vmatprep.subr.mxu0 0.0
    %478 = vmatpush1.msra.mxu0 0.0
    %479 = vmatprep.subr.mxu0 0.0
    %480 = vmatpush1.msra.mxu0 0.0
    %481 = vmatprep.subr.mxu0 0.0
    %482 = vmatpush1.msra.mxu0 0.0
    %483 = vmatprep.subr.mxu0 0.0
    %484 = vmatpush1.msra.mxu0 0.0
    %485 = vmatprep.subr.mxu0 0.0
    %486 = vmatpush1.msra.mxu0 0.0
    %487 = vmatprep.subr.mxu0 0.0
    %488 = vmatpush1.msra.mxu0 0.0
    %489 = vmatprep.subr.mxu0 0.0
    %490 = vmatpush1.msra.mxu0 0.0
    %491 = vmatprep.subr.mxu0 0.0
    %492 = vmatpush1.msra.mxu0 0.0
    %493 = vmatprep.subr.mxu0 0.0
    %494 = vmatpush1.msra.mxu0 0.0
    %495 = vmatprep.subr.mxu0 0.0
    %496 = vmatpush1.msra.mxu0 0.0
    %497 = vmatprep.subr.mxu0 0.0
    %498 = vmatpush1.msra.mxu0 0.0
    %499 = vmatprep.subr.mxu0 0.0
    %500 = vmatpush1.msra.mxu0 0.0
    %501 = vmatprep.subr.mxu0 0.0
    %502 = vmatpush1.msra.mxu0 0.0
    %503 = vmatprep.subr.mxu0 0.0
    %504 = vmatpush1.msra.mxu0 0.0
    %505 = vmatprep.subr.mxu0 0.0
    %506 = vmatpush1.msra.mxu0 0.0
    %507 = vmatprep.subr.mxu0 0.0
    %508 = vmatpush1.msra.mxu0 0.0
    %509 = vmatprep.subr.mxu0 0.0
    %510 = vmatpush1.msra.mxu0 0.0
    %511 = vmatprep.subr.mxu0 0.0
    %512 = vmatpush1.msra.mxu0 0.0
    %513 = vmatprep.subr.mxu0 0.0
    %514 = vmatpush1.msra.mxu0 0.0
    %515 = vmatprep.subr.mxu0 0.0
    %516 = vmatpush1.msra.mxu0 0.0
    %517 = vmatprep.subr.mxu0 0.0
    %518 = vmatpush1.msra.mxu0 0.0
    %519 = vmatprep.subr.mxu0 0.0
    %520 = vmatpush1.msra.mxu0 0.0
    %521 = vmatprep.subr.mxu0 0.0
    %522 = vmatpush1.msra.mxu0 0.0
    %523 = vmatprep.subr.mxu0 0.0
    %524 = vmatpush1.msra.mxu0 0.0
    %525 = vmatprep.mubr.f32.mxu0 0.0
    %526 = vmatmul.mubr.f32.gmra.mrb[0].mxu0 %v459
    %v527 = vpop.f32.mrb[0].mxu0
    %v528 = vadd.f32 0.0, %v527
    %v529 = vpop.f32.mrb[0].mxu0
    %530 = vdwg.mxu0
    %v531 = vadd.f32 %v457, %v528
    %v532 = vtanh.pop %v531
    %v533 = vmul.f32 %v532, %v272
    %v534 = vsel %vm275, %v533, 0.0
    %535 = vadd.xlane.f32.xlu0 %v534
    %v536 = vpop.xlane.xlu0 %535
    %v537 = vmul.f32 %v532, %v283
    %v538 = vsel %vm275, %v537, 0.0
    %539 = vadd.xlane.f32.xlu0 %v538
    %v540 = vpop.xlane.xlu0 %539
    %v541 = vld [vmem:[#allocation2 + $0x8] sm:$0x3]
    %v543 = vsel %vm98, %v532, 0
    %545 = vmatprep.subr.mxu0 0.0
    %546 = vmatpush1.msra.mxu0 %v182
    %547 = vmatprep.subr.mxu0 0.0
    %548 = vmatpush1.msra.mxu0 %v183
    %549 = vmatprep.subr.mxu0 0.0
    %550 = vmatpush1.msra.mxu0 %v184
    %551 = vmatprep.subr.mxu0 0.0
    %552 = vmatpush1.msra.mxu0 %v185
    %553 = vmatprep.subr.mxu0 0.0
    %554 = vmatpush1.msra.mxu0 %v186
    %555 = vmatprep.subr.mxu0 0.0
    %556 = vmatpush1.msra.mxu0 %v187
    %557 = vmatprep.subr.mxu0 0.0
    %558 = vmatpush1.msra.mxu0 %v188
    %559 = vmatprep.subr.mxu0 0.0
    %560 = vmatpush1.msra.mxu0 %v189
    %561 = vmatprep.subr.mxu0 0.0
    %562 = vmatpush1.msra.mxu0 0.0
    %563 = vmatprep.subr.mxu0 0.0
    %564 = vmatpush1.msra.mxu0 0.0
    %565 = vmatprep.subr.mxu0 0.0
    %566 = vmatpush1.msra.mxu0 0.0
    %567 = vmatprep.subr.mxu0 0.0
    %568 = vmatpush1.msra.mxu0 0.0
    %569 = vmatprep.subr.mxu0 0.0
    %570 = vmatpush1.msra.mxu0 0.0
    %571 = vmatprep.subr.mxu0 0.0
    %572 = vmatpush1.msra.mxu0 0.0
    %573 = vmatprep.subr.mxu0 0.0
    %574 = vmatpush1.msra.mxu0 0.0
    %575 = vmatprep.subr.mxu0 0.0
    %576 = vmatpush1.msra.mxu0 0.0
    %577 = vmatprep.subr.mxu0 0.0
    %578 = vmatpush1.msra.mxu0 0.0
    %579 = vmatprep.subr.mxu0 0.0
    %580 = vmatpush1.msra.mxu0 0.0
    %581 = vmatprep.subr.mxu0 0.0
    %582 = vmatpush1.msra.mxu0 0.0
    %583 = vmatprep.subr.mxu0 0.0
    %584 = vmatpush1.msra.mxu0 0.0
    %585 = vmatprep.subr.mxu0 0.0
    %586 = vmatpush1.msra.mxu0 0.0
    %587 = vmatprep.subr.mxu0 0.0
    %588 = vmatpush1.msra.mxu0 0.0
    %589 = vmatprep.subr.mxu0 0.0
    %590 = vmatpush1.msra.mxu0 0.0
    %591 = vmatprep.subr.mxu0 0.0
    %592 = vmatpush1.msra.mxu0 0.0
    %593 = vmatprep.subr.mxu0 0.0
    %594 = vmatpush1.msra.mxu0 0.0
    %595 = vmatprep.subr.mxu0 0.0
    %596 = vmatpush1.msra.mxu0 0.0
    %597 = vmatprep.subr.mxu0 0.0
    %598 = vmatpush1.msra.mxu0 0.0
    %599 = vmatprep.subr.mxu0 0.0
    %600 = vmatpush1.msra.mxu0 0.0
    %601 = vmatprep.subr.mxu0 0.0
    %602 = vmatpush1.msra.mxu0 0.0
    %603 = vmatprep.subr.mxu0 0.0
    %604 = vmatpush1.msra.mxu0 0.0
    %605 = vmatprep.subr.mxu0 0.0
    %606 = vmatpush1.msra.mxu0 0.0
    %607 = vmatprep.subr.mxu0 0.0
    %608 = vmatpush1.msra.mxu0 0.0
    %609 = vmatprep.mubr.f32.mxu0 0.0
    %610 = vmatmul.mubr.f32.gmra.mrb[0].mxu0 %v543
    %v611 = vpop.f32.mrb[0].mxu0
    %v612 = vadd.f32 0.0, %v611
    %v613 = vpop.f32.mrb[0].mxu0
    %614 = vdwg.mxu0
    %v615 = vadd.f32 %v541, %v612
    %v616 = vtanh.pop %v615
    %v617 = vmul.f32 %v616, %v272
    %v618 = vsel %vm275, %v617, 0.0
    %619 = vadd.xlane.f32.xlu0 %v618
    %v620 = vpop.xlane.xlu0 %619
    %v621 = vmul.f32 %v616, %v283
    %v622 = vsel %vm275, %v621, 0.0
    %623 = vadd.xlane.f32.xlu0 %v622
    %v624 = vpop.xlane.xlu0 %623
    %v625 = vld [vmem:[#allocation2 + $0xa] sm:$0x3]
    %v627 = vsel %vm98, %v616, 0
    %629 = vmatprep.subr.mxu0 0.0
    %630 = vmatpush1.msra.mxu0 %v182
    %631 = vmatprep.subr.mxu0 0.0
    %632 = vmatpush1.msra.mxu0 %v183
    %633 = vmatprep.subr.mxu0 0.0
    %634 = vmatpush1.msra.mxu0 %v184
    %635 = vmatprep.subr.mxu0 0.0
    %636 = vmatpush1.msra.mxu0 %v185
    %637 = vmatprep.subr.mxu0 0.0
    %638 = vmatpush1.msra.mxu0 %v186
    %639 = vmatprep.subr.mxu0 0.0
    %640 = vmatpush1.msra.mxu0 %v187
    %641 = vmatprep.subr.mxu0 0.0
    %642 = vmatpush1.msra.mxu0 %v188
    %643 = vmatprep.subr.mxu0 0.0
    %644 = vmatpush1.msra.mxu0 %v189
    %645 = vmatprep.subr.mxu0 0.0
    %646 = vmatpush1.msra.mxu0 0.0
    %647 = vmatprep.subr.mxu0 0.0
    %648 = vmatpush1.msra.mxu0 0.0
    %649 = vmatprep.subr.mxu0 0.0
    %650 = vmatpush1.msra.mxu0 0.0
    %651 = vmatprep.subr.mxu0 0.0
    %652 = vmatpush1.msra.mxu0 0.0
    %653 = vmatprep.subr.mxu0 0.0
    %654 = vmatpush1.msra.mxu0 0.0
    %655 = vmatprep.subr.mxu0 0.0
    %656 = vmatpush1.msra.mxu0 0.0
    %657 = vmatprep.subr.mxu0 0.0
    %658 = vmatpush1.msra.mxu0 0.0
    %659 = vmatprep.subr.mxu0 0.0
    %660 = vmatpush1.msra.mxu0 0.0
    %661 = vmatprep.subr.mxu0 0.0
    %662 = vmatpush1.msra.mxu0 0.0
    %663 = vmatprep.subr.mxu0 0.0
    %664 = vmatpush1.msra.mxu0 0.0
    %665 = vmatprep.subr.mxu0 0.0
    %666 = vmatpush1.msra.mxu0 0.0
    %667 = vmatprep.subr.mxu0 0.0
    %668 = vmatpush1.msra.mxu0 0.0
    %669 = vmatprep.subr.mxu0 0.0
    %670 = vmatpush1.msra.mxu0 0.0
    %671 = vmatprep.subr.mxu0 0.0
    %672 = vmatpush1.msra.mxu0 0.0
    %673 = vmatprep.subr.mxu0 0.0
    %674 = vmatpush1.msra.mxu0 0.0
    %675 = vmatprep.subr.mxu0 0.0
    %676 = vmatpush1.msra.mxu0 0.0
    %677 = vmatprep.subr.mxu0 0.0
    %678 = vmatpush1.msra.mxu0 0.0
    %679 = vmatprep.subr.mxu0 0.0
    %680 = vmatpush1.msra.mxu0 0.0
    %681 = vmatprep.subr.mxu0 0.0
    %682 = vmatpush1.msra.mxu0 0.0
    %683 = vmatprep.subr.mxu0 0.0
    %684 = vmatpush1.msra.mxu0 0.0
    %685 = vmatprep.subr.mxu0 0.0
    %686 = vmatpush1.msra.mxu0 0.0
    %687 = vmatprep.subr.mxu0 0.0
    %688 = vmatpush1.msra.mxu0 0.0
    %689 = vmatprep.subr.mxu0 0.0
    %690 = vmatpush1.msra.mxu0 0.0
    %691 = vmatprep.subr.mxu0 0.0
    %692 = vmatpush1.msra.mxu0 0.0
    %693 = vmatprep.mubr.f32.mxu0 0.0
    %694 = vmatmul.mubr.f32.gmra.mrb[0].mxu0 %v627
    %v695 = vpop.f32.mrb[0].mxu0
    %v696 = vadd.f32 0.0, %v695
    %v697 = vpop.f32.mrb[0].mxu0
    %698 = vdwg.mxu0
    %v699 = vadd.f32 %v625, %v696
    %v700 = vtanh.pop %v699
    %v701 = vmul.f32 %v700, %v272
    %v702 = vsel %vm275, %v701, 0.0
    %703 = vadd.xlane.f32.xlu0 %v702
    %v704 = vpop.xlane.xlu0 %703
    %v705 = vmul.f32 %v700, %v283
    %v706 = vsel %vm275, %v705, 0.0
    %707 = vadd.xlane.f32.xlu0 %v706
    %v708 = vpop.xlane.xlu0 %707
    %v709 = vld [vmem:[#allocation2 + $0xc] sm:$0x3]
    %v711 = vsel %vm98, %v700, 0
    %713 = vmatprep.subr.mxu0 0.0
    %714 = vmatpush1.msra.mxu0 %v182
    %715 = vmatprep.subr.mxu0 0.0
    %716 = vmatpush1.msra.mxu0 %v183
    %717 = vmatprep.subr.mxu0 0.0
    %718 = vmatpush1.msra.mxu0 %v184
    %719 = vmatprep.subr.mxu0 0.0
    %720 = vmatpush1.msra.mxu0 %v185
    %721 = vmatprep.subr.mxu0 0.0
    %722 = vmatpush1.msra.mxu0 %v186
    %723 = vmatprep.subr.mxu0 0.0
    %724 = vmatpush1.msra.mxu0 %v187
    %725 = vmatprep.subr.mxu0 0.0
    %726 = vmatpush1.msra.mxu0 %v188
    %727 = vmatprep.subr.mxu0 0.0
    %728 = vmatpush1.msra.mxu0 %v189
    %729 = vmatprep.subr.mxu0 0.0
    %730 = vmatpush1.msra.mxu0 0.0
    %731 = vmatprep.subr.mxu0 0.0
    %732 = vmatpush1.msra.mxu0 0.0
    %733 = vmatprep.subr.mxu0 0.0
    %734 = vmatpush1.msra.mxu0 0.0
    %735 = vmatprep.subr.mxu0 0.0
    %736 = vmatpush1.msra.mxu0 0.0
    %737 = vmatprep.subr.mxu0 0.0
    %738 = vmatpush1.msra.mxu0 0.0
    %739 = vmatprep.subr.mxu0 0.0
    %740 = vmatpush1.msra.mxu0 0.0
    %741 = vmatprep.subr.mxu0 0.0
    %742 = vmatpush1.msra.mxu0 0.0
    %743 = vmatprep.subr.mxu0 0.0
    %744 = vmatpush1.msra.mxu0 0.0
    %745 = vmatprep.subr.mxu0 0.0
    %746 = vmatpush1.msra.mxu0 0.0
    %747 = vmatprep.subr.mxu0 0.0
    %748 = vmatpush1.msra.mxu0 0.0
    %749 = vmatprep.subr.mxu0 0.0
    %750 = vmatpush1.msra.mxu0 0.0
    %751 = vmatprep.subr.mxu0 0.0
    %752 = vmatpush1.msra.mxu0 0.0
    %753 = vmatprep.subr.mxu0 0.0
    %754 = vmatpush1.msra.mxu0 0.0
    %755 = vmatprep.subr.mxu0 0.0
    %756 = vmatpush1.msra.mxu0 0.0
    %757 = vmatprep.subr.mxu0 0.0
    %758 = vmatpush1.msra.mxu0 0.0
    %759 = vmatprep.subr.mxu0 0.0
    %760 = vmatpush1.msra.mxu0 0.0
    %761 = vmatprep.subr.mxu0 0.0
    %762 = vmatpush1.msra.mxu0 0.0
    %763 = vmatprep.subr.mxu0 0.0
    %764 = vmatpush1.msra.mxu0 0.0
    %765 = vmatprep.subr.mxu0 0.0
    %766 = vmatpush1.msra.mxu0 0.0
    %767 = vmatprep.subr.mxu0 0.0
    %768 = vmatpush1.msra.mxu0 0.0
    %769 = vmatprep.subr.mxu0 0.0
    %770 = vmatpush1.msra.mxu0 0.0
    %771 = vmatprep.subr.mxu0 0.0
    %772 = vmatpush1.msra.mxu0 0.0
    %773 = vmatprep.subr.mxu0 0.0
    %774 = vmatpush1.msra.mxu0 0.0
    %775 = vmatprep.subr.mxu0 0.0
    %776 = vmatpush1.msra.mxu0 0.0
    %777 = vmatprep.mubr.f32.mxu0 0.0
    %778 = vmatmul.mubr.f32.gmra.mrb[0].mxu0 %v711
    %v779 = vpop.f32.mrb[0].mxu0
    %v780 = vadd.f32 0.0, %v779
    %v781 = vpop.f32.mrb[0].mxu0
    %782 = vdwg.mxu0
    %v783 = vadd.f32 %v709, %v780
    %v784 = vtanh.pop %v783
    %v785 = vmul.f32 %v784, %v272
    %v786 = vsel %vm275, %v785, 0.0
    %787 = vadd.xlane.f32.xlu0 %v786
    %v788 = vpop.xlane.xlu0 %787
    %v789 = vmul.f32 %v784, %v283
    %v790 = vsel %vm275, %v789, 0.0
    %791 = vadd.xlane.f32.xlu0 %v790
    %v792 = vpop.xlane.xlu0 %791
    %v793 = vld [vmem:[#allocation2 + $0xe] sm:$0x3]
    %v795 = vsel %vm98, %v784, 0
    %797 = vmatprep.subr.mxu0 0.0
    %798 = vmatpush1.msra.mxu0 %v182
    %799 = vmatprep.subr.mxu0 0.0
    %800 = vmatpush1.msra.mxu0 %v183
    %801 = vmatprep.subr.mxu0 0.0
    %802 = vmatpush1.msra.mxu0 %v184
    %803 = vmatprep.subr.mxu0 0.0
    %804 = vmatpush1.msra.mxu0 %v185
    %805 = vmatprep.subr.mxu0 0.0
    %806 = vmatpush1.msra.mxu0 %v186
    %807 = vmatprep.subr.mxu0 0.0
    %808 = vmatpush1.msra.mxu0 %v187
    %809 = vmatprep.subr.mxu0 0.0
    %810 = vmatpush1.msra.mxu0 %v188
    %811 = vmatprep.subr.mxu0 0.0
    %812 = vmatpush1.msra.mxu0 %v189
    %813 = vmatprep.subr.mxu0 0.0
    %814 = vmatpush1.msra.mxu0 0.0
    %815 = vmatprep.subr.mxu0 0.0
    %816 = vmatpush1.msra.mxu0 0.0
    %817 = vmatprep.subr.mxu0 0.0
    %818 = vmatpush1.msra.mxu0 0.0
    %819 = vmatprep.subr.mxu0 0.0
    %820 = vmatpush1.msra.mxu0 0.0
    %821 = vmatprep.subr.mxu0 0.0
    %822 = vmatpush1.msra.mxu0 0.0
    %823 = vmatprep.subr.mxu0 0.0
    %824 = vmatpush1.msra.mxu0 0.0
    %825 = vmatprep.subr.mxu0 0.0
    %826 = vmatpush1.msra.mxu0 0.0
    %827 = vmatprep.subr.mxu0 0.0
    %828 = vmatpush1.msra.mxu0 0.0
    %829 = vmatprep.subr.mxu0 0.0
    %830 = vmatpush1.msra.mxu0 0.0
    %831 = vmatprep.subr.mxu0 0.0
    %832 = vmatpush1.msra.mxu0 0.0
    %833 = vmatprep.subr.mxu0 0.0
    %834 = vmatpush1.msra.mxu0 0.0
    %835 = vmatprep.subr.mxu0 0.0
    %836 = vmatpush1.msra.mxu0 0.0
    %837 = vmatprep.subr.mxu0 0.0
    %838 = vmatpush1.msra.mxu0 0.0
    %839 = vmatprep.subr.mxu0 0.0
    %840 = vmatpush1.msra.mxu0 0.0
    %841 = vmatprep.subr.mxu0 0.0
    %842 = vmatpush1.msra.mxu0 0.0
    %843 = vmatprep.subr.mxu0 0.0
    %844 = vmatpush1.msra.mxu0 0.0
    %845 = vmatprep.subr.mxu0 0.0
    %846 = vmatpush1.msra.mxu0 0.0
    %847 = vmatprep.subr.mxu0 0.0
    %848 = vmatpush1.msra.mxu0 0.0
    %849 = vmatprep.subr.mxu0 0.0
    %850 = vmatpush1.msra.mxu0 0.0
    %851 = vmatprep.subr.mxu0 0.0
    %852 = vmatpush1.msra.mxu0 0.0
    %853 = vmatprep.subr.mxu0 0.0
    %854 = vmatpush1.msra.mxu0 0.0
    %855 = vmatprep.subr.mxu0 0.0
    %856 = vmatpush1.msra.mxu0 0.0
    %857 = vmatprep.subr.mxu0 0.0
    %858 = vmatpush1.msra.mxu0 0.0
    %859 = vmatprep.subr.mxu0 0.0
    %860 = vmatpush1.msra.mxu0 0.0
    %861 = vmatprep.mubr.f32.mxu0 0.0
    %862 = vmatmul.mubr.f32.gmra.mrb[0].mxu0 %v795
    %v863 = vpop.f32.mrb[0].mxu0
    %v864 = vadd.f32 0.0, %v863
    %v865 = vpop.f32.mrb[0].mxu0
    %866 = vdwg.mxu0
    %v867 = vadd.f32 %v793, %v864
    %v868 = vtanh.pop %v867
    %v869 = vmul.f32 %v868, %v272
    %v870 = vsel %vm275, %v869, 0.0
    %871 = vadd.xlane.f32.xlu0 %v870
    %v872 = vpop.xlane.xlu0 %871
    %v873 = vmul.f32 %v868, %v283
    %v874 = vsel %vm275, %v873, 0.0
    %875 = vadd.xlane.f32.xlu0 %v874
    %v876 = vpop.xlane.xlu0 %875
    %s877 = sld [smem:[#allocation10]]
    %s878 = sld [smem:[#allocation10 + $0x1]]
    %v879 = vadd.f32 %v278, %v876
    %v880 = vadd.f32 %v368, %v792
    %v881 = vadd.f32 %v452, %v708
    %v882 = vadd.f32 %v536, %v624
    %v883 = vadd.f32 %v620, %v540
    %v884 = vadd.f32 %v704, %v456
    %v885 = vadd.f32 %v788, %v372
    %v886 = vadd.f32 %v872, %v288
    %vm887 = vcmask 7168
    %v888 = vsel %vm887, %v879, %v880
    %vm889 = vcmask 15360
    %v890 = vsel %vm889, %v888, %v881
    %vm891 = vcmask 23552
    %v892 = vsel %vm891, %v890, %v882
    %vm893 = vcmask 31744
    %v894 = vsel %vm893, %v892, %v883
    %vm895 = vcmask 39936
    %v896 = vsel %vm895, %v894, %v884
    %vm897 = vcmask 48128
    %v898 = vsel %vm897, %v896, %v885
    %vm899 = vcmask 56320
    %v900 = vsel %vm899, %v898, %v886
    %v901 = vstv %s877
    %v902 = vadd.f32 %v900, %v901
    %v903 = vxor.u32 %v902, 2147483648
    %v904 = vmul.f32 %v903, 1.442695
    %v905 = vpow.pop %v904
    %v906 = vadd.f32 %v905, 1.0
    %v907 = vrcp.pop %v906
    %v908 = vmul.f32 1.0, %v907
    %vm909 = vcmask 58368
    %v910 = vsel %vm909, %v908, 0.0
    %v911 = vrot.slane %v910, 4
    %v912 = vadd.f32 %v910, %v911
    %v913 = vrot.slane %v912, 2
    %v914 = vadd.f32 %v912, %v913
    %v915 = vrot.slane %v914, 1
    %v916 = vadd.f32 %v914, %v915
    %v917 = vstv %s878
    %v918 = vmul.f32 %v916, %v917
    %vm919 = vcmask 57344
    %920 = vst.msk [vmem:[#allocation11] sm:$0x1] %vm919, %v918
    // Predicated region
    $region46: #{tpu_custom_call.1} parent=1 // pred_check
      _
    $region47: #{tpu_custom_call.1} parent=1 // pred_check_branch
      %922 = sbr.rel (0) target = $region49
    $region48: #{tpu_custom_call.1} parent=1 // pred_region
      %s924 = ssub.s32 16, 16
      %925 = vsyncadd [#allocation5], %s924
      %s927 = sshll.u32 [#allocation11], 4
      %s928 = int_to_ptr.vmem [resolvable:$true] %s927
      %930 = dma.vmem_to_hbm [thread:$0]  %s928, 16, %s7, [#allocation5]
    $region49: #{tpu_custom_call.1} parent=1 // pred_fallthru
      _
    // Predicated region
    $region50: #{tpu_custom_call.1} parent=1 // pred_check
      _
    $region51: #{tpu_custom_call.1} parent=1 // pred_check_branch
      %932 = sbr.rel (0) target = $region53
    $region52: #{tpu_custom_call.1} parent=1 // pred_region
      %933 = dma.done [#allocation5], 16
    $region53: #{tpu_custom_call.1} parent=1 // pred_fallthru
      _
    %934 = vsyncpa [#allocation4], 1
    %935 = vsyncpa [#allocation8], 1
    %936 = vsyncpa [#allocation5], 1
    %937 = vsyncpa [#allocation6], 1

</llo_original>
